<compile_context>
chip_gen: v5e
topology: v5e:2x2
jax: 0.10.0
libtpu: 0.0.40
codegen_flags: <defaults>
</compile_context>

<pallas_src>
import functools

import jax
import jax.numpy as jnp
from jax.experimental import pallas as pl
from jax.experimental.pallas import tpu as pltpu

_LANES = 128
_BLOCK_ROWS = 2048  # 2048 x 128 f32 = 1 MiB per block buffer

_ON_TPU = jax.default_backend() == "tpu"


def _dropout_kernel_tpu(seed_ref, thresh_ref, scale_ref, x_ref, o_ref):
    # Distinct PRNG stream per grid block: keeps masks i.i.d. across tiles and
    # deterministic regardless of which core runs which block.
    pltpu.prng_seed(seed_ref[0], pl.program_id(0))
    bits = pltpu.bitcast(pltpu.prng_random_bits(x_ref.shape), jnp.uint32)
    x = x_ref[...]
    keep = bits < thresh_ref[0]                      # keep with prob (1 - p)
    scaled = x * scale_ref[0].astype(x.dtype)        # stays in x's dtype (bf16 ok)
    o_ref[...] = jnp.where(keep, scaled, jnp.zeros_like(scaled))


def _dropout_kernel_bits(thresh_ref, scale_ref, x_ref, bits_ref, o_ref):
    # Portable fallback: random bits are a tiled input instead of the TPU HW PRNG.
    x = x_ref[...]
    keep = bits_ref[...] < thresh_ref[0]
    scaled = x * scale_ref[0].astype(x.dtype)
    o_ref[...] = jnp.where(keep, scaled, jnp.zeros_like(scaled))


@functools.partial(jax.jit, static_argnames=("p",))
def _dropout_impl(x, seed, p):
    orig_shape = x.shape
    total = x.size
    rows = pl.cdiv(total, _LANES)
    padded = rows * _LANES

    xf = x.reshape(-1)
    if padded != total:
        xf = jnp.pad(xf, (0, padded - total))
    x2d = xf.reshape(rows, _LANES)

    block_rows = min(_BLOCK_ROWS, rows)
    grid = (pl.cdiv(rows, block_rows),)

    keep_prob = 1.0 - p
    threshold = min(int(round(keep_prob * (2 ** 32))), 2 ** 32 - 1)
    thresh_arr = jnp.asarray([threshold], dtype=jnp.uint32)
    scale_arr = jnp.asarray([1.0 / keep_prob], dtype=jnp.float32)

    x_spec = pl.BlockSpec((block_rows, _LANES), lambda i: (i, 0))
    smem_spec = pl.BlockSpec(memory_space=pltpu.MemorySpace.SMEM)
    out_shape = jax.ShapeDtypeStruct((rows, _LANES), x.dtype)
    compiler_params = pltpu.CompilerParams(dimension_semantics=("parallel",))

    if _ON_TPU:
        seed_arr = seed.astype(jnp.int32).reshape(1)
        out2d = pl.pallas_call(
            _dropout_kernel_tpu,
            grid=grid,
            in_specs=[smem_spec, smem_spec, smem_spec, x_spec],
            out_specs=x_spec,
            out_shape=out_shape,
            compiler_params=compiler_params,
        )(seed_arr, thresh_arr, scale_arr, x2d)
    else:
        # Non-TPU backends (e.g. CPU interpret sandbox): pltpu.prng_* has no
        # lowering there, so generate the bits with jax.random outside the kernel.
        key = jax.random.PRNGKey(seed)
        bits = jax.random.bits(key, (rows, _LANES), jnp.uint32)
        out2d = pl.pallas_call(
            _dropout_kernel_bits,
            grid=grid,
            in_specs=[smem_spec, smem_spec, x_spec, x_spec],
            out_specs=x_spec,
            out_shape=out_shape,
            compiler_params=compiler_params,
        )(thresh_arr, scale_arr, x2d, bits)

    out = out2d.reshape(-1)
    if padded != total:
        out = out[:total]
    return out.reshape(orig_shape)


def dropout(x, p, seed, *, training=True):
    """Inverted dropout: y = x * Bernoulli(1-p) / (1-p) in training, identity in eval."""
    p = float(p)
    if not training or p == 0.0:
        return x
    if p >= 1.0:
        return jnp.zeros_like(x)  # PyTorch returns all zeros for p = 1
    return _dropout_impl(x, jnp.asarray(seed, dtype=jnp.int32), p)


if __name__ == "__main__":
    key = jax.random.PRNGKey(0)
    # NCHW, matching the PyTorch convention: batch=2, channels=4, spatial=16.
    x = jax.random.normal(key, (2, 4, 16, 16), dtype=jnp.float32)

    p = 0.5
    y_train = dropout(x, p, seed=1234, training=True)
    y_eval = dropout(x, p, seed=1234, training=False)
    jax.block_until_ready(y_train)
    jax.block_until_ready(y_eval)

    # Basic sanity: eval path is identity; train path zeros ~p of the elements
    # and rescales survivors by exactly 1/(1-p) (= 2.0 here, so exact in f32).
    assert y_train.shape == x.shape and y_train.dtype == x.dtype
    assert bool(jnp.all(y_eval == x))
    kept = y_train != 0.0
    assert bool(jnp.allclose(jnp.where(kept, y_train, 0.0),
                             jnp.where(kept, x / (1.0 - p), 0.0),
                             rtol=1e-5, atol=1e-6))
    keep_frac = float(jnp.mean(kept.astype(jnp.float32)))
    assert 0.3 < keep_frac < 0.7, f"unexpected keep fraction {keep_frac}"

    print("KERNEL_OK")
</pallas_src>

<mosaic_0001>
module attributes {stable_mosaic.version = 11 : i64} {
  func.func @_dropout_kernel_bits(%arg0: i32, %arg1: memref<1xi32, #tpu.memory_space<smem>>, %arg2: memref<1xf32, #tpu.memory_space<smem>>, %arg3: memref<16x128xf32, #tpu.memory_space<vmem>>, %arg4: memref<16x128xi32, #tpu.memory_space<vmem>>, %arg5: memref<16x128xf32, #tpu.memory_space<vmem>>) attributes {dimension_semantics = [#tpu.dimension_semantics<parallel>], iteration_bounds = array<i64: 1>, scalar_prefetch = 0 : i64, scratch_operands = 0 : i64, tpu.core_type = #tpu.core_type<tc>, window_params = [{transform_indices = @transform_0, window_bounds = array<i64: 1>}, {transform_indices = @transform_1, window_bounds = array<i64: 1>}, {transform_indices = @transform_2, window_bounds = array<i64: 16, 128>}, {transform_indices = @transform_3, window_bounds = array<i64: 16, 128>}, {transform_indices = @transform_4, window_bounds = array<i64: 16, 128>}]} {
    %c0 = arith.constant 0 : index
    %c0_0 = arith.constant 0 : index
    %0 = vector.load %arg3[%c0, %c0_0] : memref<16x128xf32, #tpu.memory_space<vmem>>, vector<16x128xf32>
    %c0_1 = arith.constant 0 : index
    %c0_2 = arith.constant 0 : index
    %1 = vector.load %arg4[%c0_1, %c0_2] : memref<16x128xi32, #tpu.memory_space<vmem>>, vector<16x128xi32>
    %c0_3 = arith.constant 0 : index
    %2 = memref.load %arg1[%c0_3] : memref<1xi32, #tpu.memory_space<smem>>
    %3 = vector.broadcast %2 : i32 to vector<16x128xi32>
    %4 = arith.cmpi ult, %1, %3 : vector<16x128xi32>
    %c0_4 = arith.constant 0 : index
    %5 = memref.load %arg2[%c0_4] : memref<1xf32, #tpu.memory_space<smem>>
    %6 = vector.broadcast %5 : f32 to vector<16x128xf32>
    %7 = arith.mulf %0, %6 : vector<16x128xf32>
    %cst = arith.constant 0.000000e+00 : f32
    %8 = vector.broadcast %cst : f32 to vector<16x128xf32>
    %9 = arith.select %4, %7, %8 : vector<16x128xi1>, vector<16x128xf32>
    %c0_5 = arith.constant 0 : index
    %c0_6 = arith.constant 0 : index
    %10 = vector.load %arg5[%c0_5, %c0_6] : memref<16x128xf32, #tpu.memory_space<vmem>>, vector<16x128xf32>
    tpu.vector_store %arg5[%c0_5, %c0_6], %9 {strides = array<i32>} : memref<16x128xf32, #tpu.memory_space<vmem>>, vector<16x128xf32>,
    return
  }
  func.func @transform_0(%arg0: i32) -> i32 {
    %c0_i32 = arith.constant 0 : i32
    %c0_i32_0 = arith.constant 0 : i32
    return %c0_i32 : i32
  }
  func.func @transform_1(%arg0: i32) -> i32 {
    %c0_i32 = arith.constant 0 : i32
    %c0_i32_0 = arith.constant 0 : i32
    return %c0_i32 : i32
  }
  func.func @transform_2(%arg0: i32) -> (i32, i32) {
    %c0_i32 = arith.constant 0 : i32
    %c0_i32_0 = arith.constant 0 : i32
    return %arg0, %c0_i32 : i32, i32
  }
  func.func @transform_3(%arg0: i32) -> (i32, i32) {
    %c0_i32 = arith.constant 0 : i32
    %c0_i32_0 = arith.constant 0 : i32
    return %arg0, %c0_i32 : i32, i32
  }
  func.func @transform_4(%arg0: i32) -> (i32, i32) {
    %c0_i32 = arith.constant 0 : i32
    %c0_i32_0 = arith.constant 0 : i32
    return %arg0, %c0_i32 : i32, i32
  }
}

</mosaic_0001>

<llo_original>
// kernel: _dropout_impl.1
$region0: #{_dropout_impl.1}
  #allocation0 [shape = 'u32[]', space=smem, size = 0x4, offset = 0x4, fixed_abs, tag = 'smem constant byte address 0x4 - core index']
  #allocation1 [shape = 'u32[72,128]{1,0:T(1,128)}', space=vmem, size = 0x9000, scoped, tag = 'internal scratch']
  #allocation2 [shape = 'u32[1]{0:T(128)S(6)}', space=smem, size = 0x200, scoped, tag = 'scoped memory for _dropout_impl.1']
  #allocation3 [shape = 'f32[1]{0:T(128)S(6)}', space=smem, size = 0x200, scoped, tag = 'scoped memory for _dropout_impl.1']
  %s0 = inlined_call_operand.<no memory space> [shape: u32[1], index: 0, kind: input, shape index: {}]
  %s1 = inlined_call_operand.<no memory space> [shape: f32[1], index: 1, kind: input, shape index: {}]
  %s2 = inlined_call_operand.vmem [shape: f32[16,128], index: 2, kind: input, shape index: {}]
  %s3 = inlined_call_operand.vmem [shape: u32[16,128], index: 3, kind: input, shape index: {}]
  %s4 = inlined_call_operand.vmem [shape: f32[16,128], index: 4, kind: output, shape index: {}]
  %s5 = sld [smem:[#allocation0]]
  $region26: #{_dropout_impl.1} parent=0
    _
  %s7 = ssub.s32 1, %s5
  %s8 = scalar_select 0, %s7, %s5
  %9 = sst [smem:[#allocation2]] %s0
  %10 = sst [smem:[#allocation3]] %s1
  // Predicated region
  $region2: #{_dropout_impl.1} parent=0 // pred_check
    _
  $region3: #{_dropout_impl.1} parent=0 // pred_check_branch
    %12 = sbr.rel (0) target = $region5
  $region4: #{_dropout_impl.1} parent=0 // pred_region
    _
  $region5: #{_dropout_impl.1} parent=0 // pred_fallthru
    _
  // Predicated region
  $region6: #{_dropout_impl.1} parent=0 // pred_check
    _
  $region7: #{_dropout_impl.1} parent=0 // pred_check_branch
    %14 = sbr.rel (0) target = $region9
  $region8: #{_dropout_impl.1} parent=0 // pred_region
    _
  $region9: #{_dropout_impl.1} parent=0 // pred_fallthru
    _
  // Predicated region
  $region10: #{_dropout_impl.1} parent=0 // pred_check
    _
  $region11: #{_dropout_impl.1} parent=0 // pred_check_branch
    %16 = sbr.rel (0) target = $region13
  $region12: #{_dropout_impl.1} parent=0 // pred_region
    _
  $region13: #{_dropout_impl.1} parent=0 // pred_fallthru
    _
  // Predicated region
  $region14: #{_dropout_impl.1} parent=0 // pred_check
    _
  $region15: #{_dropout_impl.1} parent=0 // pred_check_branch
    %18 = sbr.rel (0) target = $region17
  $region16: #{_dropout_impl.1} parent=0 // pred_region
    _
  $region17: #{_dropout_impl.1} parent=0 // pred_fallthru
    _
  %v19 = vld [vmem:[%s2] sm:$0xff]
  %v20 = vld [vmem:[%s2 + $0x8] sm:$0xff]
  %v21 = vld [vmem:[%s3] sm:$0xff]
  %v22 = vld [vmem:[%s3 + $0x8] sm:$0xff]
  %s23 = sld [smem:[#allocation2]]
  %v24 = vstv %s23
  %v25 = vadd.s32 %v21, 2147483648
  %v26 = vadd.s32 %v24, 2147483648
  %vm27 = vcmp.lt.s32.totalorder %v25, %v26
  %v28 = vadd.s32 %v22, 2147483648
  %v29 = vadd.s32 %v24, 2147483648
  %vm30 = vcmp.lt.s32.totalorder %v28, %v29
  %s31 = sld [smem:[#allocation3]]
  %v32 = vstv %s31
  %v33 = vmul.f32 %v19, %v32
  %v34 = vmul.f32 %v20, %v32
  %v35 = vsel %vm27, %v33, 0.0
  %v36 = vsel %vm30, %v34, 0.0
  %37 = vst [vmem:[%s4] sm:$0xff] %v35
  %38 = vst [vmem:[%s4 + $0x8] sm:$0xff] %v36
  // Predicated region
  $region18: #{_dropout_impl.1} parent=0 // pred_check
    _
  $region19: #{_dropout_impl.1} parent=0 // pred_check_branch
    %40 = sbr.rel (0) target = $region21
  $region20: #{_dropout_impl.1} parent=0 // pred_region
    _
  $region21: #{_dropout_impl.1} parent=0 // pred_fallthru
    _
  // Predicated region
  $region22: #{_dropout_impl.1} parent=0 // pred_check
    _
  $region23: #{_dropout_impl.1} parent=0 // pred_check_branch
    %42 = sbr.rel (0) target = $region25
  $region24: #{_dropout_impl.1} parent=0 // pred_region
    _
  $region25: #{_dropout_impl.1} parent=0 // pred_fallthru
    _

</llo_original>
